<compile_context>
chip_gen: v6e
topology: v6e:2x2x1
jax: 0.10.0
libtpu: 0.0.40
codegen_flags: <defaults>
</compile_context>

<pallas_src>
import functools

import jax
import jax.numpy as jnp
from jax.experimental import pallas as pl
from jax.experimental.pallas import tpu as pltpu

LN_EPS = 1e-5
TK = 256                       # K (reduction) tile, multiple of 128 (v5e-friendly)
TOK_TILE = 32                  # gather rows per grid step


def _round_up(x, m):
    return (x + m - 1) // m * m


def _fused_vmem_limit(tb, tk, tn, in_itemsize, out_itemsize):
    """Scoped-VMEM limit derived from actual (double-buffered) block sizes."""
    need = (2 * tb * tk * in_itemsize      # x tile, double-buffered
            + 2 * tk * tn * in_itemsize    # weight K-slice, double-buffered
            + 2 * 3 * tn * 4               # bias / gamma / beta
            + 2 * tb * tn * out_itemsize   # output tile, double-buffered
            + tb * tn * 4)                 # f32 accumulator scratch
    return int(min(max(need + (2 << 20), 4 << 20), 32 << 20))


# ---------------------------------------------------------------------------
# Kernel 1: fused Linear (+bias) [+ LayerNorm] [+ GELU]
#   grid = (batch tiles [PARALLEL], H tiles [PARALLEL], K tiles [ARBITRARY, last])
#   f32 accumulator in VMEM scratch; LN/GELU in the k==last finalize.
#   (H is only tiled when apply_ln=False; LayerNorm needs the full row.)
# ---------------------------------------------------------------------------
def _fused_linear_kernel(x_ref, w_ref, b_ref, g_ref, bt_ref, o_ref, acc_ref,
                         *, apply_ln, apply_gelu, eps):
    k = pl.program_id(2)

    @pl.when(k == 0)
    def _():
        acc_ref[...] = jnp.zeros_like(acc_ref)

    # bf16 x bf16 -> f32 accumulate on the MXU
    acc_ref[...] += jnp.dot(x_ref[...], w_ref[...],
                            preferred_element_type=jnp.float32)

    @pl.when(k == pl.num_programs(2) - 1)
    def _():
        y = acc_ref[...] + b_ref[...]                       # f32
        if apply_ln:
            # two-pass centered statistics (matches torch LayerNorm, biased var)
            mu = jnp.mean(y, axis=-1, keepdims=True)
            d = y - mu
            var = jnp.mean(d * d, axis=-1, keepdims=True)
            y = d * jax.lax.rsqrt(var + eps)
            y = y * g_ref[...] + bt_ref[...]
        if apply_gelu:
            # TODO(synk): torch nn.GELU() defaults to the exact erf form; the tanh
            # approximation is used here.
            c = 0.7978845608028654                          # sqrt(2/pi)
            y = 0.5 * y * (1.0 + jnp.tanh(c * (y + 0.044715 * y * y * y)))
        o_ref[...] = y.astype(o_ref.dtype)


def fused_linear(x, w, b, gamma=None, beta=None, *, apply_ln=False,
                 apply_gelu=False, compute_dtype=jnp.bfloat16,
                 tk=TK, tn=None, out_dtype=jnp.float32):
    """y = [GELU][LayerNorm](x @ w + b); matmul in `compute_dtype`, everything else f32.

    `w` may already be pre-cast to `compute_dtype` and pre-padded along E to a
    multiple of `tk` (see prepare_projector_params); raw f32 weights also work.
    """
    B, E = x.shape
    Ep, H = w.shape
    assert Ep >= E

    if gamma is None:
        gamma = jnp.ones((H,), jnp.float32)
    if beta is None:
        beta = jnp.zeros((H,), jnp.float32)

    # adaptive batch tile: >=16 rows (full bf16 sublane packing), <=128 (MXU M feed);
    # the [E,H] weight is streamed once per batch tile, so big tiles minimize HBM traffic.
    tb = min(128, _round_up(max(B, 16), 16))
    b_pad = _round_up(B, tb)
    if b_pad != B:
        x = jnp.pad(x, ((0, b_pad - B), (0, 0)))

    # K tiling (fallback pad if the weight wasn't pre-padded at init)
    if Ep > tk and Ep % tk != 0:
        ep2 = _round_up(Ep, tk)
        w = jnp.pad(w, ((0, ep2 - Ep), (0, 0)))
        Ep = ep2
    tk_eff = Ep if Ep <= tk else tk
    if E != Ep:
        x = jnp.pad(x, ((0, 0), (0, Ep - E)))               # zeros add nothing to the acc

    # N (H) tiling: full H when LayerNorm needs the whole row, else split large H so
    # v7x's 2 TensorCores each stream half the weight even at a single batch tile.
    if tn is None:
        tn = H
        if not apply_ln:
            for cand in (2048, 1024):
                if H % cand == 0 and H // cand >= 2:
                    tn = cand
                    break

    xc = x if x.dtype == compute_dtype else x.astype(compute_dtype)
    wc = w if w.dtype == compute_dtype else w.astype(compute_dtype)
    b2 = b.reshape(1, H).astype(jnp.float32)
    g2 = gamma.reshape(1, H).astype(jnp.float32)
    bt2 = beta.reshape(1, H).astype(jnp.float32)

    vmem_limit = _fused_vmem_limit(tb, tk_eff, tn,
                                   jnp.dtype(compute_dtype).itemsize,
                                   jnp.dtype(out_dtype).itemsize)

    out = pl.pallas_call(
        functools.partial(_fused_linear_kernel, apply_ln=apply_ln,
                          apply_gelu=apply_gelu, eps=LN_EPS),
        out_shape=jax.ShapeDtypeStruct((b_pad, H), out_dtype),
        grid_spec=pltpu.PrefetchScalarGridSpec(
            num_scalar_prefetch=0,
            grid=(b_pad // tb, H // tn, Ep // tk_eff),
            in_specs=[
                pl.BlockSpec((tb, tk_eff), lambda i, j, k: (i, k)),   # x tile
                pl.BlockSpec((tk_eff, tn), lambda i, j, k: (k, j)),   # weight slice
                pl.BlockSpec((1, tn), lambda i, j, k: (0, j)),        # bias
                pl.BlockSpec((1, tn), lambda i, j, k: (0, j)),        # ln gamma
                pl.BlockSpec((1, tn), lambda i, j, k: (0, j)),        # ln beta
            ],
            out_specs=pl.BlockSpec((tb, tn), lambda i, j, k: (i, j)),
            scratch_shapes=[pltpu.VMEM((tb, tn), jnp.float32)]),
        compiler_params=pltpu.CompilerParams(
            dimension_semantics=(pltpu.PARALLEL, pltpu.PARALLEL, pltpu.ARBITRARY),
            vmem_limit_bytes=vmem_limit),
    )(xc, wc, b2, g2, bt2)
    return out[:B]


# ---------------------------------------------------------------------------
# Kernel 2 (auxiliary, used alongside GraphProjector in stage1):
# batched embedding-row gather.  Table stays in HBM; ids live in SMEM via scalar
# prefetch; each grid step DMAs TOK_TILE rows straight into the output block.
# ---------------------------------------------------------------------------
def _gather_kernel(ids_ref, table_ref, o_ref, sems, *, tok_tile):
    t = pl.program_id(0)
    copies = []
    for r in range(tok_tile):                 # static unroll: tok_tile row DMAs in flight
        row = ids_ref[t * tok_tile + r]
        cp = pltpu.make_async_copy(table_ref.at[pl.ds(row, 1), :],
                                   o_ref.at[pl.ds(r, 1), :],     # direct into out block
                                   sems.at[r])
        cp.start()
        copies.append(cp)
    for cp in copies:
        cp.wait()


def embedding_lookup(ids, table, *, tok_tile=TOK_TILE):
    """ids: (N,) int32, table: (V, H) -> (N, H) gathered rows."""
    (N,) = ids.shape
    V, H = table.shape
    n_pad = _round_up(N, tok_tile)
    ids_p = jnp.pad(ids.astype(jnp.int32), (0, n_pad - N))
    vmem_limit = int(min(max(2 * tok_tile * H * jnp.dtype(table.dtype).itemsize
                             + (2 << 20), 4 << 20), 32 << 20))
    out = pl.pallas_call(
        functools.partial(_gather_kernel, tok_tile=tok_tile),
        out_shape=jax.ShapeDtypeStruct((n_pad, H), table.dtype),
        grid_spec=pltpu.PrefetchScalarGridSpec(
            num_scalar_prefetch=1,                              # ids -> SMEM
            grid=(n_pad // tok_tile,),
            in_specs=[pl.BlockSpec(memory_space=pl.ANY)],       # table stays in HBM
            out_specs=pl.BlockSpec((tok_tile, H), lambda t, ids: (t, 0)),
            scratch_shapes=[pltpu.SemaphoreType.DMA((tok_tile,))]),
        compiler_params=pltpu.CompilerParams(
            dimension_semantics=(pltpu.PARALLEL,),
            vmem_limit_bytes=vmem_limit),
    )(ids_p, table)
    return out[:N]


# ---------------------------------------------------------------------------
# GraphProjector: params + forward (mirrors the torch module)
# ---------------------------------------------------------------------------
def init_graph_projector(key, embedding_dim, lm_hidden_dim, *,
                         projection_type="linear", projection_dim=None):
    if projection_dim is None:
        projection_dim = int((embedding_dim * lm_hidden_dim) ** 0.5)
    ks = jax.random.split(key, 2)
    if projection_type == "linear":
        return {
            "w1": jax.random.normal(ks[0], (embedding_dim, lm_hidden_dim), jnp.float32) * 0.02,
            "b1": jnp.zeros((lm_hidden_dim,), jnp.float32),
            "ln_g": jnp.ones((lm_hidden_dim,), jnp.float32),
            "ln_b": jnp.zeros((lm_hidden_dim,), jnp.float32),
        }
    if projection_type == "2-layer-mlp":
        return {
            "w1": jax.random.normal(ks[0], (embedding_dim, projection_dim), jnp.float32) * 0.02,
            "b1": jnp.zeros((projection_dim,), jnp.float32),
            "ln_g": jnp.ones((projection_dim,), jnp.float32),
            "ln_b": jnp.zeros((projection_dim,), jnp.float32),
            "w2": jax.random.normal(ks[1], (projection_dim, lm_hidden_dim), jnp.float32) * 0.02,
            "b2": jnp.zeros((lm_hidden_dim,), jnp.float32),
        }
    raise ValueError(f"unsupported projection_type: {projection_type}")


def prepare_projector_params(params, *, compute_dtype=jnp.bfloat16, tk=TK):
    """One-time conversion to compute layout: weights bf16, E pre-padded to a
    multiple of tk.  Removes the per-forward cast+pad HBM round trip."""
    def prep_w(w):
        e, _ = w.shape
        if e > tk and e % tk != 0:
            w = jnp.pad(w, ((0, _round_up(e, tk) - e), (0, 0)))
        return w.astype(compute_dtype)

    out = dict(params)
    for key in ("w1", "w2"):
        if key in params:
            out[key] = prep_w(params[key])
    return out


def graph_projector_forward(params, x, *, projection_type="linear",
                            compute_dtype=jnp.bfloat16):
    if projection_type == "linear":
        return fused_linear(x, params["w1"], params["b1"],
                            params["ln_g"], params["ln_b"],
                            apply_ln=True, compute_dtype=compute_dtype)
    if projection_type == "2-layer-mlp":
        # intermediate activation kept in bf16: halves its HBM traffic and feeds the
        # second matmul without a cast (LN/GELU already ran in f32).
        h = fused_linear(x, params["w1"], params["b1"],
                         params["ln_g"], params["ln_b"],
                         apply_ln=True, apply_gelu=True,
                         compute_dtype=compute_dtype,
                         out_dtype=compute_dtype)
        # TODO(synk): nn.Dropout(0.1) is identity in eval mode; training-mode dropout
        # would be fused into the second matmul with pltpu.prng_seed/prng_random_bits.
        return fused_linear(h, params["w2"], params["b2"],
                            apply_ln=False, apply_gelu=False,
                            compute_dtype=compute_dtype)
    raise ValueError(f"unsupported projection_type: {projection_type}")


# ---------------------------------------------------------------------------
# Pure-JAX reference (same bf16 matmul operands / bf16 intermediate, f32 LN)
# ---------------------------------------------------------------------------
def graph_projector_reference(params, x, *, projection_type="linear",
                              compute_dtype=jnp.bfloat16):
    def lin(v, w, b):
        return jnp.dot(v.astype(compute_dtype), w.astype(compute_dtype),
                       preferred_element_type=jnp.float32) + b

    def ln(y, g, bt):
        mu = jnp.mean(y, axis=-1, keepdims=True)
        var = jnp.mean((y - mu) ** 2, axis=-1, keepdims=True)
        return (y - mu) * jax.lax.rsqrt(var + LN_EPS) * g + bt

    def gelu_tanh(y):
        c = 0.7978845608028654
        return 0.5 * y * (1.0 + jnp.tanh(c * (y + 0.044715 * y ** 3)))

    if projection_type == "linear":
        return ln(lin(x, params["w1"], params["b1"]), params["ln_g"], params["ln_b"])
    h = gelu_tanh(ln(lin(x, params["w1"], params["b1"]), params["ln_g"], params["ln_b"]))
    h = h.astype(compute_dtype)        # kernel stores the intermediate in bf16
    return lin(h, params["w2"], params["b2"])


# ---------------------------------------------------------------------------
# Demo / self-check
# ---------------------------------------------------------------------------
if __name__ == "__main__":
    key = jax.random.PRNGKey(0)
    B, E, H = 2, 512, 256          # graphs per batch, graph-embedding dim, LM hidden dim
    k0, k1, k2, k3, k4 = jax.random.split(key, 5)

    lin_raw = init_graph_projector(k0, E, H, projection_type="linear")
    mlp_raw = init_graph_projector(k1, E, H, projection_type="2-layer-mlp",
                                   projection_dim=384)
    lin_params = prepare_projector_params(lin_raw)     # weights bf16, E padded to tk
    mlp_params = prepare_projector_params(mlp_raw)
    x = jax.random.normal(k2, (B, E), jnp.float32)

    fwd_lin = jax.jit(functools.partial(graph_projector_forward,
                                        projection_type="linear"))
    fwd_mlp = jax.jit(functools.partial(graph_projector_forward,
                                        projection_type="2-layer-mlp"))

    out_lin = fwd_lin(lin_params, x)
    out_mlp = fwd_mlp(mlp_params, x)
    jax.block_until_ready((out_lin, out_mlp))

    assert out_lin.shape == (B, H) and out_lin.dtype == jnp.float32
    assert out_mlp.shape == (B, H)

    ref_lin = graph_projector_reference(lin_raw, x, projection_type="linear")
    ref_mlp = graph_projector_reference(mlp_raw, x, projection_type="2-layer-mlp")
    assert jnp.allclose(out_lin, ref_lin, atol=1e-2, rtol=1e-2), \
        f"linear projector mismatch, max abs err {jnp.max(jnp.abs(out_lin - ref_lin))}"
    assert jnp.allclose(out_mlp, ref_mlp, atol=1e-2, rtol=1e-2), \
        f"2-layer-mlp projector mismatch, max abs err {jnp.max(jnp.abs(out_mlp - ref_mlp))}"

    # auxiliary batched gather (lm.get_input_embeddings()(input_ids) in stage1)
    V, S = 128, 19                 # small vocab, token count not a multiple of TOK_TILE
    table = jax.random.normal(k3, (V, H), jnp.float32) * 0.02
    ids = jax.random.randint(k4, (S,), 0, V, jnp.int32)
    gathered = jax.jit(embedding_lookup)(ids, table)
    jax.block_until_ready(gathered)
    assert gathered.shape == (S, H)
    assert bool(jnp.array_equal(gathered, table[ids]))

    print("KERNEL_OK")
</pallas_src>

<mosaic_0001>
module attributes {stable_mosaic.version = 11 : i64} {
  func.func @_fused_linear_kernel(%arg0: i32, %arg1: i32, %arg2: i32, %arg3: memref<16x256xbf16, #tpu.memory_space<vmem>>, %arg4: memref<256x256xbf16, #tpu.memory_space<vmem>>, %arg5: memref<1x256xf32, #tpu.memory_space<vmem>>, %arg6: memref<1x256xf32, #tpu.memory_space<vmem>>, %arg7: memref<1x256xf32, #tpu.memory_space<vmem>>, %arg8: memref<16x256xf32, #tpu.memory_space<vmem>>, %arg9: memref<16x256xf32, #tpu.memory_space<vmem>>) attributes {dimension_semantics = [#tpu.dimension_semantics<parallel>, #tpu.dimension_semantics<parallel>, #tpu.dimension_semantics<arbitrary>], iteration_bounds = array<i64: 1, 1, 2>, scalar_prefetch = 0 : i64, scratch_operands = 1 : i64, tpu.core_type = #tpu.core_type<tc>, window_params = [{transform_indices = @transform_0, window_bounds = array<i64: 16, 256>}, {transform_indices = @transform_1, window_bounds = array<i64: 256, 256>}, {transform_indices = @transform_2, window_bounds = array<i64: 1, 256>}, {transform_indices = @transform_3, window_bounds = array<i64: 1, 256>}, {transform_indices = @transform_4, window_bounds = array<i64: 1, 256>}, {transform_indices = @transform_5, window_bounds = array<i64: 16, 256>}]} {
    %c0_i32 = arith.constant 0 : i32
    %0 = arith.cmpi eq, %arg2, %c0_i32 : i32
    %1 = arith.extui %0 : i1 to i32
    %c0_i32_0 = arith.constant 0 : i32
    %2 = arith.cmpi ne, %1, %c0_i32_0 : i32
    scf.if %2 {
      %cst_9 = arith.constant 0.000000e+00 : f32
      %12 = vector.broadcast %cst_9 : f32 to vector<16x256xf32>
      %c0_10 = arith.constant 0 : index
      %c0_11 = arith.constant 0 : index
      %13 = vector.load %arg9[%c0_10, %c0_11] : memref<16x256xf32, #tpu.memory_space<vmem>>, vector<16x256xf32>
      tpu.vector_store %arg9[%c0_10, %c0_11], %12 {strides = array<i32>} : memref<16x256xf32, #tpu.memory_space<vmem>>, vector<16x256xf32>,
    } else {
    }
    %c0 = arith.constant 0 : index
    %c0_1 = arith.constant 0 : index
    %3 = vector.load %arg9[%c0, %c0_1] : memref<16x256xf32, #tpu.memory_space<vmem>>, vector<16x256xf32>
    %c0_2 = arith.constant 0 : index
    %c0_3 = arith.constant 0 : index
    %4 = vector.load %arg3[%c0_2, %c0_3] : memref<16x256xbf16, #tpu.memory_space<vmem>>, vector<16x256xbf16>
    %c0_4 = arith.constant 0 : index
    %c0_5 = arith.constant 0 : index
    %5 = vector.load %arg4[%c0_4, %c0_5] : memref<256x256xbf16, #tpu.memory_space<vmem>>, vector<256x256xbf16>
    %cst = arith.constant dense<0.000000e+00> : vector<16x256xf32>
    %6 = tpu.matmul %4, %5, %cst {dimension_numbers = #tpu.dot_dimension_numbers<[1], [0], [0], [1], [0, 0, 1, 1], [], []>} : vector<16x256xbf16>, vector<256x256xbf16>, vector<16x256xf32> -> vector<16x256xf32>
    %7 = arith.addf %3, %6 : vector<16x256xf32>
    %c0_6 = arith.constant 0 : index
    %c0_7 = arith.constant 0 : index
    %8 = vector.load %arg9[%c0_6, %c0_7] : memref<16x256xf32, #tpu.memory_space<vmem>>, vector<16x256xf32>
    tpu.vector_store %arg9[%c0_6, %c0_7], %7 {strides = array<i32>} : memref<16x256xf32, #tpu.memory_space<vmem>>, vector<16x256xf32>,
    %c1_i32 = arith.constant 1 : i32
    %9 = arith.cmpi eq, %arg2, %c1_i32 : i32
    %10 = arith.extui %9 : i1 to i32
    %c0_i32_8 = arith.constant 0 : i32
    %11 = arith.cmpi ne, %10, %c0_i32_8 : i32
    scf.if %11 {
      %c0_9 = arith.constant 0 : index
      %c0_10 = arith.constant 0 : index
      %12 = vector.load %arg9[%c0_9, %c0_10] : memref<16x256xf32, #tpu.memory_space<vmem>>, vector<16x256xf32>
      %c0_11 = arith.constant 0 : index
      %c0_12 = arith.constant 0 : index
      %13 = vector.load %arg5[%c0_11, %c0_12] : memref<1x256xf32, #tpu.memory_space<vmem>>, vector<1x256xf32>
      %14 = vector.broadcast %13 : vector<1x256xf32> to vector<16x256xf32>
      %15 = arith.addf %12, %14 : vector<16x256xf32>
      %cst_13 = arith.constant dense<0.000000e+00> : vector<16xf32>
      %16 = vector.multi_reduction <add>, %15, %cst_13 [1] : vector<16x256xf32> to vector<16xf32>
      %17 = vector.shape_cast %16 : vector<16xf32> to vector<16x1xf32>
      %cst_14 = arith.constant 2.560000e+02 : f32
      %18 = vector.broadcast %cst_14 : f32 to vector<16x1xf32>
      %19 = arith.divf %17, %18 : vector<16x1xf32>
      %20 = vector.broadcast %19 : vector<16x1xf32> to vector<16x256xf32>
      %21 = arith.subf %15, %20 : vector<16x256xf32>
      %22 = arith.mulf %21, %21 : vector<16x256xf32>
      %cst_15 = arith.constant dense<0.000000e+00> : vector<16xf32>
      %23 = vector.multi_reduction <add>, %22, %cst_15 [1] : vector<16x256xf32> to vector<16xf32>
      %24 = vector.shape_cast %23 : vector<16xf32> to vector<16x1xf32>
      %cst_16 = arith.constant 2.560000e+02 : f32
      %25 = vector.broadcast %cst_16 : f32 to vector<16x1xf32>
      %26 = arith.divf %24, %25 : vector<16x1xf32>
      %cst_17 = arith.constant 9.99999974E-6 : f32
      %27 = vector.broadcast %cst_17 : f32 to vector<16x1xf32>
      %28 = arith.addf %26, %27 : vector<16x1xf32>
      %29 = math.rsqrt %28 : vector<16x1xf32>
      %30 = vector.broadcast %29 : vector<16x1xf32> to vector<16x256xf32>
      %31 = arith.mulf %21, %30 : vector<16x256xf32>
      %c0_18 = arith.constant 0 : index
      %c0_19 = arith.constant 0 : index
      %32 = vector.load %arg6[%c0_18, %c0_19] : memref<1x256xf32, #tpu.memory_space<vmem>>, vector<1x256xf32>
      %33 = vector.broadcast %32 : vector<1x256xf32> to vector<16x256xf32>
      %34 = arith.mulf %31, %33 : vector<16x256xf32>
      %c0_20 = arith.constant 0 : index
      %c0_21 = arith.constant 0 : index
      %35 = vector.load %arg7[%c0_20, %c0_21] : memref<1x256xf32, #tpu.memory_space<vmem>>, vector<1x256xf32>
      %36 = vector.broadcast %35 : vector<1x256xf32> to vector<16x256xf32>
      %37 = arith.addf %34, %36 : vector<16x256xf32>
      %c0_22 = arith.constant 0 : index
      %c0_23 = arith.constant 0 : index
      %38 = vector.load %arg8[%c0_22, %c0_23] : memref<16x256xf32, #tpu.memory_space<vmem>>, vector<16x256xf32>
      tpu.vector_store %arg8[%c0_22, %c0_23], %37 {strides = array<i32>} : memref<16x256xf32, #tpu.memory_space<vmem>>, vector<16x256xf32>,
    } else {
    }
    return
  }
  func.func @transform_0(%arg0: i32, %arg1: i32, %arg2: i32) -> (i32, i32) {
    %c0_i32 = arith.constant 0 : i32
    return %arg0, %arg2 : i32, i32
  }
  func.func @transform_1(%arg0: i32, %arg1: i32, %arg2: i32) -> (i32, i32) {
    %c0_i32 = arith.constant 0 : i32
    return %arg2, %arg1 : i32, i32
  }
  func.func @transform_2(%arg0: i32, %arg1: i32, %arg2: i32) -> (i32, i32) {
    %c0_i32 = arith.constant 0 : i32
    %c0_i32_0 = arith.constant 0 : i32
    return %c0_i32, %arg1 : i32, i32
  }
  func.func @transform_3(%arg0: i32, %arg1: i32, %arg2: i32) -> (i32, i32) {
    %c0_i32 = arith.constant 0 : i32
    %c0_i32_0 = arith.constant 0 : i32
    return %c0_i32, %arg1 : i32, i32
  }
  func.func @transform_4(%arg0: i32, %arg1: i32, %arg2: i32) -> (i32, i32) {
    %c0_i32 = arith.constant 0 : i32
    %c0_i32_0 = arith.constant 0 : i32
    return %c0_i32, %arg1 : i32, i32
  }
  func.func @transform_5(%arg0: i32, %arg1: i32, %arg2: i32) -> (i32, i32) {
    %c0_i32 = arith.constant 0 : i32
    return %arg0, %arg1 : i32, i32
  }
}

</mosaic_0001>

<llo_original>
// kernel: graph_projector_forward.1
$region0: #{graph_projector_forward.1}
  #allocation0 [shape = 'u32[]', space=smem, size = 0x4, offset = 0x4, fixed_abs, tag = 'smem constant byte address 0x4 - core index']
  #allocation1 [shape = 'u32[144,128]{1,0:T(1,128)}', space=vmem, size = 0x12000, scoped, tag = 'internal scratch']
  #allocation2 [shape = 'f32[16,256]{1,0:T(8,128)}', space=vmem, size = 0x4000, scoped, tag = 'scratch operand']
  %s0 = inlined_call_operand.vmem [shape: bf16[16,512], index: 0, kind: input, shape index: {}]
  %s1 = inlined_call_operand.hbm [shape: bf16[512,256], index: 1, kind: input, shape index: {}]
  %s2 = inlined_call_operand.vmem [shape: f32[1,256], index: 2, kind: input, shape index: {}]
  %s3 = inlined_call_operand.vmem [shape: f32[1,256], index: 3, kind: input, shape index: {}]
  %s4 = inlined_call_operand.vmem [shape: f32[1,256], index: 4, kind: input, shape index: {}]
  %s5 = inlined_call_operand.vmem [shape: f32[16,256], index: 5, kind: output, shape index: {}]
  %s6 = sld [smem:[#allocation0]]
  $region103: #{graph_projector_forward.1} parent=0
    _
  %s8 = ssub.s32 1, %s6
  %s9 = scalar_select 0, %s8, %s6
  $region1: #{graph_projector_forward.1} parent=0
    #allocation3 [shape = 'u8[16384]{0}', space=vmem, size = 0x4000, scoped, tag = 'input window, operand 0']
    #allocation4 [shape = 'u8[262144]{0}', space=vmem, size = 0x40000, scoped, tag = 'input window, operand 1']
    #allocation5 [shape = 's32[2]{0}', space=sflag, size = 0x8, scoped, tag = 'scoped memory for graph_projector_forward.1']
    %10 = vsyncpa [#allocation5], 0
    %s11 = scalar_lea.sflag [#allocation5], 1
    %12 = vsyncpa %s11, 0
    loop: start=0, step=1, limit=4
    $region2: #{graph_projector_forward.1} parent=1 // loop_pre_header
      _
    $region3: #{graph_projector_forward.1} parent=1 // loop_header
      %s14 = sphi 0, %s18
      %p15 = scmp.ge.s32.totalorder %s14, 4
      %s21 = sphi 0, %s40
      %s22 = sphi 0, %s36
      %s23 = sphi 0, %s32
      %s24 = sphi 0, %s21
      %s25 = sphi 0, %s22
      %s26 = sphi 0, %s23
      %s27 = sphi 0, %s24
      %s28 = sphi 0, %s25
      %s29 = sphi 0, %s26
      %s45 = sphi 0, %s47
      %s48 = sphi 0, %s45
      %s49 = sphi 0, %s48
      %s65 = sphi 0, %s49
      %s73 = sphi 0, %s75
      %s76 = sphi 0, %s73
      %s77 = sphi 0, %s76
      %s93 = sphi 0, %s77
      %s99 = sphi 0, %s101
      %s102 = sphi 0, %s99
      %s103 = sphi 0, %s102
      %s119 = sphi 0, %s103
      %s125 = sphi 0, %s127
      %s128 = sphi 0, %s125
      %s129 = sphi 0, %s128
      %s145 = sphi 0, %s129
      %s151 = sphi 0, %s153
      %s154 = sphi 0, %s151
      %s155 = sphi 0, %s154
      %s171 = sphi 0, %s155
      %s179 = sphi 0, %s181
      %s182 = sphi 0, %s179
      %s183 = sphi 0, %s182
      %s199 = sphi 0, %s183
    $region4: #{graph_projector_forward.1} parent=1 // loop_header_branch
      %17 = sbr.rel (%p15) target = $region8
    $region5: #{graph_projector_forward.1} parent=1 // loop_body
      %s19 = ssub.s32 %s14, 1
      %s20 = ssub.s32 %s14, 2
      %s30 = sadd.s32 1, %s23
      %p31 = scmp.ge.s32.totalorder %s30, 2
      %s32 = scalar_select %p31, 0, %s30
      %s33 = sadd.s32 1, %s22
      %s34 = scalar_select %p31, %s33, %s22
      %p35 = scmp.ge.s32.totalorder %s34, 1
      %s36 = scalar_select %p35, 0, %s34
      %s37 = sadd.s32 1, %s21
      %s38 = scalar_select %p35, %s37, %s21
      %p39 = scmp.ge.s32.totalorder %s38, 1
      %s40 = scalar_select %p39, 0, %s38
      %s41 = ssub.s32 %s21, %s40
      %s42 = ssub.s32 %s23, %s32
      %s43 = sor.u32 %s41, %s42
      %p44 = scmp.eq.s32.totalorder %s43, 0
      %s46 = sadd.s32 %s45, 1
      %s47 = scalar_select %p44, %s45, %s46
      %p50 = pneg %p44
      %p51 = scmp.eq.s32.totalorder %s14, 1
      %p52 = por %p50, %p51
      %p53 = scmp.ne.s32.totalorder %s45, %s48
      %p54 = scmp.eq.s32.totalorder %s14, 0
      %p55 = por %p53, %p54
      %p56 = scmp.ne.s32.totalorder %s45, %s48
      %p57 = scmp.eq.s32.totalorder %s19, 1
      %p58 = por %p56, %p57
      %p59 = scmp.ne.s32.totalorder %s48, %s49
      %p60 = scmp.eq.s32.totalorder %s19, 0
      %p61 = por %p59, %p60
      %p62 = scmp.ne.s32.totalorder %s48, %s49
      %p63 = scmp.eq.s32.totalorder %s20, 1
      %p64 = por %p62, %p63
      %p66 = scmp.ne.s32.totalorder %s49, %s65
      %p67 = scmp.eq.s32.totalorder %s20, 0
      %p68 = por %p66, %p67
      %s69 = ssub.s32 %s23, %s32
      %s70 = ssub.s32 %s22, %s36
      %s71 = sor.u32 %s69, %s70
      %p72 = scmp.eq.s32.totalorder %s71, 0
      %s74 = sadd.s32 %s73, 1
      %s75 = scalar_select %p72, %s73, %s74
      %p78 = pneg %p72
      %p79 = scmp.eq.s32.totalorder %s14, 1
      %p80 = por %p78, %p79
      %p81 = scmp.ne.s32.totalorder %s73, %s76
      %p82 = scmp.eq.s32.totalorder %s14, 0
      %p83 = por %p81, %p82
      %p84 = scmp.ne.s32.totalorder %s73, %s76
      %p85 = scmp.eq.s32.totalorder %s19, 1
      %p86 = por %p84, %p85
      %p87 = scmp.ne.s32.totalorder %s76, %s77
      %p88 = scmp.eq.s32.totalorder %s19, 0
      %p89 = por %p87, %p88
      %p90 = scmp.ne.s32.totalorder %s76, %s77
      %p91 = scmp.eq.s32.totalorder %s20, 1
      %p92 = por %p90, %p91
      %p94 = scmp.ne.s32.totalorder %s77, %s93
      %p95 = scmp.eq.s32.totalorder %s20, 0
      %p96 = por %p94, %p95
      %s97 = ssub.s32 %s22, %s36
      %p98 = scmp.eq.s32.totalorder %s97, 0
      %s100 = sadd.s32 %s99, 1
      %s101 = scalar_select %p98, %s99, %s100
      %p104 = pneg %p98
      %p105 = scmp.eq.s32.totalorder %s14, 1
      %p106 = por %p104, %p105
      %p107 = scmp.ne.s32.totalorder %s99, %s102
      %p108 = scmp.eq.s32.totalorder %s14, 0
      %p109 = por %p107, %p108
      %p110 = scmp.ne.s32.totalorder %s99, %s102
      %p111 = scmp.eq.s32.totalorder %s19, 1
      %p112 = por %p110, %p111
      %p113 = scmp.ne.s32.totalorder %s102, %s103
      %p114 = scmp.eq.s32.totalorder %s19, 0
      %p115 = por %p113, %p114
      %p116 = scmp.ne.s32.totalorder %s102, %s103
      %p117 = scmp.eq.s32.totalorder %s20, 1
      %p118 = por %p116, %p117
      %p120 = scmp.ne.s32.totalorder %s103, %s119
      %p121 = scmp.eq.s32.totalorder %s20, 0
      %p122 = por %p120, %p121
      %s123 = ssub.s32 %s22, %s36
      %p124 = scmp.eq.s32.totalorder %s123, 0
      %s126 = sadd.s32 %s125, 1
      %s127 = scalar_select %p124, %s125, %s126
      %p130 = pneg %p124
      %p131 = scmp.eq.s32.totalorder %s14, 1
      %p132 = por %p130, %p131
      %p133 = scmp.ne.s32.totalorder %s125, %s128
      %p134 = scmp.eq.s32.totalorder %s14, 0
      %p135 = por %p133, %p134
      %p136 = scmp.ne.s32.totalorder %s125, %s128
      %p137 = scmp.eq.s32.totalorder %s19, 1
      %p138 = por %p136, %p137
      %p139 = scmp.ne.s32.totalorder %s128, %s129
      %p140 = scmp.eq.s32.totalorder %s19, 0
      %p141 = por %p139, %p140
      %p142 = scmp.ne.s32.totalorder %s128, %s129
      %p143 = scmp.eq.s32.totalorder %s20, 1
      %p144 = por %p142, %p143
      %p146 = scmp.ne.s32.totalorder %s129, %s145
      %p147 = scmp.eq.s32.totalorder %s20, 0
      %p148 = por %p146, %p147
      %s149 = ssub.s32 %s22, %s36
      %p150 = scmp.eq.s32.totalorder %s149, 0
      %s152 = sadd.s32 %s151, 1
      %s153 = scalar_select %p150, %s151, %s152
      %p156 = pneg %p150
      %p157 = scmp.eq.s32.totalorder %s14, 1
      %p158 = por %p156, %p157
      %p159 = scmp.ne.s32.totalorder %s151, %s154
      %p160 = scmp.eq.s32.totalorder %s14, 0
      %p161 = por %p159, %p160
      %p162 = scmp.ne.s32.totalorder %s151, %s154
      %p163 = scmp.eq.s32.totalorder %s19, 1
      %p164 = por %p162, %p163
      %p165 = scmp.ne.s32.totalorder %s154, %s155
      %p166 = scmp.eq.s32.totalorder %s19, 0
      %p167 = por %p165, %p166
      %p168 = scmp.ne.s32.totalorder %s154, %s155
      %p169 = scmp.eq.s32.totalorder %s20, 1
      %p170 = por %p168, %p169
      %p172 = scmp.ne.s32.totalorder %s155, %s171
      %p173 = scmp.eq.s32.totalorder %s20, 0
      %p174 = por %p172, %p173
      %s175 = ssub.s32 %s21, %s40
      %s176 = ssub.s32 %s22, %s36
      %s177 = sor.u32 %s175, %s176
      %p178 = scmp.eq.s32.totalorder %s177, 0
      %s180 = sadd.s32 %s179, 1
      %s181 = scalar_select %p178, %s179, %s180
      %p184 = pneg %p178
      %p185 = scmp.eq.s32.totalorder %s14, 1
      %p186 = por %p184, %p185
      %p187 = scmp.ne.s32.totalorder %s179, %s182
      %p188 = scmp.eq.s32.totalorder %s14, 0
      %p189 = por %p187, %p188
      %p190 = scmp.ne.s32.totalorder %s179, %s182
      %p191 = scmp.eq.s32.totalorder %s19, 1
      %p192 = por %p190, %p191
      %p193 = scmp.ne.s32.totalorder %s182, %s183
      %p194 = scmp.eq.s32.totalorder %s19, 0
      %p195 = por %p193, %p194
      %p196 = scmp.ne.s32.totalorder %s182, %s183
      %p197 = scmp.eq.s32.totalorder %s20, 1
      %p198 = por %p196, %p197
      %p200 = scmp.ne.s32.totalorder %s183, %s199
      %p201 = scmp.eq.s32.totalorder %s20, 0
      %p202 = por %p200, %p201
      %p203 = scmp.le.s32.totalorder 1, %s14
      %p204 = scmp.lt.s32.totalorder %s14, 3
      %p205 = pnand %p203, %p204
      %p206 = pneg %p205
      // Predicated region
      $region9: #{graph_projector_forward.1} parent=5 // pred_check
        _
      $region10: #{graph_projector_forward.1} parent=5 // pred_check_branch
        %208 = sbr.rel (%p205) target = $region12
      $region11: #{graph_projector_forward.1} parent=5 // pred_region
        %s209 = ssub.s32 %s14, 1
        // Predicated region
        $region13: #{graph_projector_forward.1} parent=11 // pred_check
          %p210 = pneg %p115
        $region14: #{graph_projector_forward.1} parent=11 // pred_check_branch
          %212 = sbr.rel (%p210) target = $region16
        $region15: #{graph_projector_forward.1} parent=11 // pred_region
          %s213 = smul.u32 2, %s25
          %p214 = scmp.lt.s32.totalorder %s213, 1
          %s215 = scalar_select %p214, %s213, 1
          %s216 = scalar_lea.vmem %s2, %s215
          %s217 = smul.u32 2, %s25
        $region16: #{graph_projector_forward.1} parent=11 // pred_fallthru
          _
        // Predicated region
        $region17: #{graph_projector_forward.1} parent=11 // pred_check
          %p218 = pneg %p141
        $region18: #{graph_projector_forward.1} parent=11 // pred_check_branch
          %220 = sbr.rel (%p218) target = $region20
        $region19: #{graph_projector_forward.1} parent=11 // pred_region
          %s221 = smul.u32 2, %s25
          %p222 = scmp.lt.s32.totalorder %s221, 1
          %s223 = scalar_select %p222, %s221, 1
          %s224 = scalar_lea.vmem %s3, %s223
          %s225 = smul.u32 2, %s25
        $region20: #{graph_projector_forward.1} parent=11 // pred_fallthru
          _
        // Predicated region
        $region21: #{graph_projector_forward.1} parent=11 // pred_check
          %p226 = pneg %p167
        $region22: #{graph_projector_forward.1} parent=11 // pred_check_branch
          %228 = sbr.rel (%p226) target = $region24
        $region23: #{graph_projector_forward.1} parent=11 // pred_region
          %s229 = smul.u32 2, %s25
          %p230 = scmp.lt.s32.totalorder %s229, 1
          %s231 = scalar_select %p230, %s229, 1
          %s232 = scalar_lea.vmem %s4, %s231
          %s233 = smul.u32 2, %s25
        $region24: #{graph_projector_forward.1} parent=11 // pred_fallthru
          _
      $region12: #{graph_projector_forward.1} parent=5 // pred_fallthru
        _
      %p234 = scmp.lt.s32.totalorder %s14, 2
      // Predicated region
      $region25: #{graph_projector_forward.1} parent=5 // pred_check
        %p235 = pneg %p234
      $region26: #{graph_projector_forward.1} parent=5 // pred_check_branch
        %237 = sbr.rel (%p235) target = $region28
      $region27: #{graph_projector_forward.1} parent=5 // pred_region
        // Predicated region
        $region29: #{graph_projector_forward.1} parent=27 // pred_check
          %p238 = pneg %p55
        $region30: #{graph_projector_forward.1} parent=27 // pred_check_branch
          %240 = sbr.rel (%p238) target = $region32
        $region31: #{graph_projector_forward.1} parent=27 // pred_region
          %s241 = sand.u32 %s45, 1
          %s242 = sand.u32 %s45, 1
          %s243 = smul.addr %s242, 16
          %s244 = scalar_lea.vmem [#allocation3], %s243
          %s245 = smul.u32 2, %s21
          %s246 = smul.u32 2, %s23
          %s247 = smul.addr %s245, 4
          %s248 = sadd.s32 %s246, %s247
          %s249 = smul.addr %s248, 4
          %s250 = scalar_lea.vmem %s0, %s249
          // Predicated region
          $region33: #{graph_projector_forward.1} parent=31 // pred_check
            _
          $region34: #{graph_projector_forward.1} parent=31 // pred_check_branch
            %252 = sbr.rel (0) target = $region36
          $region35: #{graph_projector_forward.1} parent=31 // pred_region
            // Predicated region
            $region37: #{graph_projector_forward.1} parent=35 // pred_check
              _
            $region38: #{graph_projector_forward.1} parent=35 // pred_check_branch
              %254 = sbr.rel (0) target = $region40
            $region39: #{graph_projector_forward.1} parent=35 // pred_region
              // Predicated region
              $region52: #{graph_projector_forward.1} parent=39 // pred_check
                _
              $region53: #{graph_projector_forward.1} parent=39 // pred_check_branch
                %272 = sbr.rel (0) target = $region55
              $region54: #{graph_projector_forward.1} parent=39 // pred_region
                loop: start=0, step=1, limit=1
                $region56: #{graph_projector_forward.1} parent=54 // loop_pre_header
                  _
                $region57: #{graph_projector_forward.1} parent=54 // loop_header
                  %s274 = sphi 0, %s278
                  %p275 = scmp.ge.s32.totalorder %s274, 1
                  %s279 = sphi %s250, %s250
                  %s280 = sphi %s244, %s244
                $region58: #{graph_projector_forward.1} parent=54 // loop_header_branch
                  %277 = sbr.rel (%p275) target = $region62
                $region59: #{graph_projector_forward.1} parent=54 // loop_body
                  %v281 = vld [vmem:[%s279] sm:$0xff]
                  %282 = vst [vmem:[%s280] sm:$0xff] %v281
                  %v283 = vld [vmem:[%s279 + $0x10] sm:$0xff]
                  %284 = vst [vmem:[%s280 + $0x8] sm:$0xff] %v283
                $region60: #{graph_projector_forward.1} parent=54 // loop_footer
                  %s278 = sadd.s32 1, %s274
                $region61: #{graph_projector_forward.1} parent=54 // loop_footer_branch
                  %273 = sbr.rel target = $region57
                $region62: #{graph_projector_forward.1} parent=54 // loop_exit
                  _
              $region55: #{graph_projector_forward.1} parent=39 // pred_fallthru
                _
              // Predicated region
              $region63: #{graph_projector_forward.1} parent=39 // pred_check
                _
              $region64: #{graph_projector_forward.1} parent=39 // pred_check_branch
                %286 = sbr.rel target = $region66
              $region65: #{graph_projector_forward.1} parent=39 // pred_region
                _
              $region66: #{graph_projector_forward.1} parent=39 // pred_fallthru
                _
            $region40: #{graph_projector_forward.1} parent=35 // pred_fallthru
              _
            // Predicated region
            $region41: #{graph_projector_forward.1} parent=35 // pred_check
              _
            $region42: #{graph_projector_forward.1} parent=35 // pred_check_branch
              %256 = sbr.rel target = $region44
            $region43: #{graph_projector_forward.1} parent=35 // pred_region
              %s258 = ssub.s32 256, 1
              loop: start=0, step=1, limit=1
              $region45: #{graph_projector_forward.1} parent=43 // loop_pre_header
                _
              $region46: #{graph_projector_forward.1} parent=43 // loop_header
                %s260 = sphi 0, %s264
                %p261 = scmp.ge.s32.totalorder %s260, 1
                %s265 = sphi %s250, %s250
                %s266 = sphi %s244, %s244
              $region47: #{graph_projector_forward.1} parent=43 // loop_header_branch
                %263 = sbr.rel (%p261) target = $region51
              $region48: #{graph_projector_forward.1} parent=43 // loop_body
                %v267 = vld [vmem:[%s265] sm:%s258]
                %268 = vst [vmem:[%s266] sm:%s258] %v267
                %v269 = vld [vmem:[%s265 + $0x10] sm:%s258]
                %270 = vst [vmem:[%s266 + $0x8] sm:%s258] %v269
              $region49: #{graph_projector_forward.1} parent=43 // loop_footer
                %s264 = sadd.s32 1, %s260
              $region50: #{graph_projector_forward.1} parent=43 // loop_footer_branch
                %259 = sbr.rel target = $region46
              $region51: #{graph_projector_forward.1} parent=43 // loop_exit
                _
            $region44: #{graph_projector_forward.1} parent=35 // pred_fallthru
              _
          $region36: #{graph_projector_forward.1} parent=31 // pred_fallthru
            _
          %287 = vnop
        $region32: #{graph_projector_forward.1} parent=27 // pred_fallthru
          _
        // Predicated region
        $region67: #{graph_projector_forward.1} parent=27 // pred_check
          %p288 = pneg %p83
        $region68: #{graph_projector_forward.1} parent=27 // pred_check_branch
          %290 = sbr.rel (%p288) target = $region70
        $region69: #{graph_projector_forward.1} parent=27 // pred_region
          %s291 = sand.u32 %s73, 1
          %s292 = scalar_lea.sflag [#allocation5], %s291
          %s293 = sand.u32 %s73, 1
          %s294 = smul.addr %s293, 256
          %s295 = scalar_lea.vmem [#allocation4], %s294
          %s296 = smul.u32 32, %s23
          %s297 = smul.u32 2, %s22
          %s299 = ssub.s32 4096, 4096
          %300 = vsyncadd %s292, %s299
          %s301 = smul.addr %s296, 2
          %s302 = sadd.s32 %s297, %s301
          %s303 = smul.addr %s302, 64
          %s304 = scalar_lea.hbm %s1, %s303
          %s305 = sshll.u32 %s295, 4
          %s306 = int_to_ptr.vmem [resolvable:$true] %s305
          %311 = dma.hbm_to_vmem [thread:$0]  %s304, 4096, %s306, %s292, 128, 128, 8
        $region70: #{graph_projector_forward.1} parent=27 // pred_fallthru
          _
      $region28: #{graph_projector_forward.1} parent=5 // pred_fallthru
        _
      %p312 = scmp.le.s32.totalorder 1, %s14
      %p313 = scmp.lt.s32.totalorder %s14, 3
      %p314 = pnand %p312, %p313
      %p315 = pneg %p314
      // Predicated region
      $region71: #{graph_projector_forward.1} parent=5 // pred_check
        _
      $region72: #{graph_projector_forward.1} parent=5 // pred_check_branch
        %317 = sbr.rel (%p314) target = $region74
      $region73: #{graph_projector_forward.1} parent=5 // pred_region
        %s318 = ssub.s32 %s14, 1
        %s319 = sand.u32 %s48, 1
        %s320 = sand.u32 %s48, 1
        %s321 = smul.addr %s320, 16
        %s322 = scalar_lea.vmem [#allocation3], %s321
        // Predicated region
        $region75: #{graph_projector_forward.1} parent=73 // pred_check
          %p323 = pneg %p61
        $region76: #{graph_projector_forward.1} parent=73 // pred_check_branch
          %325 = sbr.rel (%p323) target = $region78
        $region77: #{graph_projector_forward.1} parent=73 // pred_region
          _
        $region78: #{graph_projector_forward.1} parent=73 // pred_fallthru
          _
        %s326 = sand.u32 %s76, 1
        %s327 = scalar_lea.sflag [#allocation5], %s326
        %s328 = sand.u32 %s76, 1
        %s329 = smul.addr %s328, 256
        %s330 = scalar_lea.vmem [#allocation4], %s329
        // Predicated region
        $region79: #{graph_projector_forward.1} parent=73 // pred_check
          %p331 = pneg %p89
        $region80: #{graph_projector_forward.1} parent=73 // pred_check_branch
          %333 = sbr.rel (%p331) target = $region82
        $region81: #{graph_projector_forward.1} parent=73 // pred_region
          %334 = dma.done %s327, 4096
        $region82: #{graph_projector_forward.1} parent=73 // pred_fallthru
          _
        %s335 = sand.u32 %s48, 1
        %s336 = sand.u32 %s48, 1
        %s337 = smul.addr %s336, 16
        %s338 = scalar_lea.vmem [#allocation3], %s337
        %p339 = pneg %p61
        %p340 = pneg %p58
        %s341 = sand.u32 %s76, 1
        %s342 = scalar_lea.sflag [#allocation5], %s341
        %s343 = sand.u32 %s76, 1
        %s344 = smul.addr %s343, 256
        %s345 = scalar_lea.vmem [#allocation4], %s344
        %p346 = pneg %p89
        %p347 = pneg %p86
        %s348 = smul.u32 2, %s25
        %p349 = scmp.lt.s32.totalorder %s348, 1
        %s350 = scalar_select %p349, %s348, 1
        %s351 = scalar_lea.vmem %s2, %s350
        %p352 = pneg %p115
        %p353 = pneg %p112
        %s354 = smul.u32 2, %s25
        %p355 = scmp.lt.s32.totalorder %s354, 1
        %s356 = scalar_select %p355, %s354, 1
        %s357 = scalar_lea.vmem %s3, %s356
        %p358 = pneg %p141
        %p359 = pneg %p138
        %s360 = smul.u32 2, %s25
        %p361 = scmp.lt.s32.totalorder %s360, 1
        %s362 = scalar_select %p361, %s360, 1
        %s363 = scalar_lea.vmem %s4, %s362
        %p364 = pneg %p167
        %p365 = pneg %p164
        %p366 = pneg %p195
        %p367 = pneg %p192
        %s368 = smul.u32 2, %s24
        %s369 = smul.u32 2, %s25
        %p370 = scmp.lt.s32.totalorder %s368, 1
        %s371 = scalar_select %p370, %s368, 1
        %p372 = scmp.lt.s32.totalorder %s369, 1
        %s373 = scalar_select %p372, %s369, 1
        %s374 = smul.addr %s371, 2
        %s375 = sadd.s32 %s373, %s374
        %s376 = smul.addr %s375, 8
        %s377 = scalar_lea.vmem %s5, %s376
        %s378 = smul.u32 2, %s24
        %s379 = smul.u32 2, %s26
        %s380 = smul.u32 32, %s26
        %s381 = smul.u32 2, %s25
        %s382 = smul.u32 2, %s25
        %p383 = scmp.lt.s32.totalorder %s382, 1
        %s384 = scalar_select %p383, %s382, 1
        %s385 = scalar_lea.vmem %s2, %s384
        %s386 = smul.u32 2, %s25
        %s387 = smul.u32 2, %s25
        %p388 = scmp.lt.s32.totalorder %s387, 1
        %s389 = scalar_select %p388, %s387, 1
        %s390 = scalar_lea.vmem %s3, %s389
        %s391 = smul.u32 2, %s25
        %s392 = smul.u32 2, %s25
        %p393 = scmp.lt.s32.totalorder %s392, 1
        %s394 = scalar_select %p393, %s392, 1
        %s395 = scalar_lea.vmem %s4, %s394
        %s396 = smul.u32 2, %s25
        %s397 = smul.u32 2, %s24
        %s398 = smul.u32 2, %s25
        %p399 = scmp.lt.s32.totalorder %s397, 1
        %s400 = scalar_select %p399, %s397, 1
        %p401 = scmp.lt.s32.totalorder %s398, 1
        %s402 = scalar_select %p401, %s398, 1
        %s403 = smul.addr %s400, 2
        %s404 = sadd.s32 %s402, %s403
        %s405 = smul.addr %s404, 8
        %s406 = scalar_lea.vmem %s5, %s405
        %s407 = smul.u32 2, %s24
        %s408 = smul.u32 2, %s25
        %p409 = scmp.eq.s32.totalorder %s26, 0
        // Predicated region
        $region83: #{graph_projector_forward.1} parent=73 // pred_check
          %p410 = pneg %p409
        $region84: #{graph_projector_forward.1} parent=73 // pred_check_branch
          %412 = sbr.rel (%p410) target = $region86
        $region85: #{graph_projector_forward.1} parent=73 // pred_region
          %413 = vst [vmem:[#allocation2] sm:$0xff] 0.0
          %414 = vst [vmem:[#allocation2 + $0x8] sm:$0xff] 0.0
          %415 = vst [vmem:[#allocation2 + $0x10] sm:$0xff] 0.0
          %416 = vst [vmem:[#allocation2 + $0x18] sm:$0xff] 0.0
        $region86: #{graph_projector_forward.1} parent=73 // pred_fallthru
          _
        %v417 = vld [vmem:[#allocation2] sm:$0xff]
        %v418 = vld [vmem:[#allocation2 + $0x8] sm:$0xff]
        %v419 = vld [vmem:[#allocation2 + $0x10] sm:$0xff]
        %v420 = vld [vmem:[#allocation2 + $0x18] sm:$0xff]
        %v421 = vld [vmem:[%s322] sm:$0xff]
        %v422 = vld [vmem:[%s322 + $0x8] sm:$0xff]
        %v423 = vld [vmem:[%s330] sm:$0xff]
        %v424 = vld [vmem:[%s330 + $0x8] sm:$0xff]
        %v425 = vld [vmem:[%s330 + $0x10] sm:$0xff]
        %v426 = vld [vmem:[%s330 + $0x18] sm:$0xff]
        %v427 = vld [vmem:[%s330 + $0x20] sm:$0xff]
        %v428 = vld [vmem:[%s330 + $0x28] sm:$0xff]
        %v429 = vld [vmem:[%s330 + $0x30] sm:$0xff]
        %v430 = vld [vmem:[%s330 + $0x38] sm:$0xff]
        %v431 = vld [vmem:[%s330 + $0x40] sm:$0xff]
        %v432 = vld [vmem:[%s330 + $0x48] sm:$0xff]
        %v433 = vld [vmem:[%s330 + $0x50] sm:$0xff]
        %v434 = vld [vmem:[%s330 + $0x58] sm:$0xff]
        %v435 = vld [vmem:[%s330 + $0x60] sm:$0xff]
        %v436 = vld [vmem:[%s330 + $0x68] sm:$0xff]
        %v437 = vld [vmem:[%s330 + $0x70] sm:$0xff]
        %v438 = vld [vmem:[%s330 + $0x78] sm:$0xff]
        %v439 = vld [vmem:[%s330 + $0x80] sm:$0xff]
        %v440 = vld [vmem:[%s330 + $0x88] sm:$0xff]
        %v441 = vld [vmem:[%s330 + $0x90] sm:$0xff]
        %v442 = vld [vmem:[%s330 + $0x98] sm:$0xff]
        %v443 = vld [vmem:[%s330 + $0xa0] sm:$0xff]
        %v444 = vld [vmem:[%s330 + $0xa8] sm:$0xff]
        %v445 = vld [vmem:[%s330 + $0xb0] sm:$0xff]
        %v446 = vld [vmem:[%s330 + $0xb8] sm:$0xff]
        %v447 = vld [vmem:[%s330 + $0xc0] sm:$0xff]
        %v448 = vld [vmem:[%s330 + $0xc8] sm:$0xff]
        %v449 = vld [vmem:[%s330 + $0xd0] sm:$0xff]
        %v450 = vld [vmem:[%s330 + $0xd8] sm:$0xff]
        %v451 = vld [vmem:[%s330 + $0xe0] sm:$0xff]
        %v452 = vld [vmem:[%s330 + $0xe8] sm:$0xff]
        %v453 = vld [vmem:[%s330 + $0xf0] sm:$0xff]
        %v454 = vld [vmem:[%s330 + $0xf8] sm:$0xff]
        %v457 = vunpack.c.l.b16 %v421
        %v458 = vunpack.c.h.b16 %v421
        %v459 = vunpack.c.l.b16 %v422
        %v460 = vunpack.c.h.b16 %v422
        %v461 = vpack.c.b16 %v459, %v457
        %v462 = vpack.c.b16 %v460, %v458
        %v497 = vunpack.c.l.b16 %v423
        %v498 = vunpack.c.h.b16 %v423
        %v499 = vunpack.c.l.b16 %v424
        %v500 = vunpack.c.h.b16 %v424
        %v501 = vunpack.c.l.b16 %v425
        %v502 = vunpack.c.h.b16 %v425
        %v503 = vunpack.c.l.b16 %v426
        %v504 = vunpack.c.h.b16 %v426
        %v505 = vunpack.c.l.b16 %v427
        %v506 = vunpack.c.h.b16 %v427
        %v507 = vunpack.c.l.b16 %v428
        %v508 = vunpack.c.h.b16 %v428
        %v509 = vunpack.c.l.b16 %v429
        %v510 = vunpack.c.h.b16 %v429
        %v511 = vunpack.c.l.b16 %v430
        %v512 = vunpack.c.h.b16 %v430
        %v513 = vunpack.c.l.b16 %v431
        %v514 = vunpack.c.h.b16 %v431
        %v515 = vunpack.c.l.b16 %v432
        %v516 = vunpack.c.h.b16 %v432
        %v517 = vunpack.c.l.b16 %v433
        %v518 = vunpack.c.h.b16 %v433
        %v519 = vunpack.c.l.b16 %v434
        %v520 = vunpack.c.h.b16 %v434
        %v521 = vunpack.c.l.b16 %v435
        %v522 = vunpack.c.h.b16 %v435
        %v523 = vunpack.c.l.b16 %v436
        %v524 = vunpack.c.h.b16 %v436
        %v525 = vunpack.c.l.b16 %v437
        %v526 = vunpack.c.h.b16 %v437
        %v527 = vunpack.c.l.b16 %v438
        %v528 = vunpack.c.h.b16 %v438
        %v529 = vunpack.c.l.b16 %v439
        %v530 = vunpack.c.h.b16 %v439
        %v531 = vunpack.c.l.b16 %v440
        %v532 = vunpack.c.h.b16 %v440
        %v533 = vunpack.c.l.b16 %v441
        %v534 = vunpack.c.h.b16 %v441
        %v535 = vunpack.c.l.b16 %v442
        %v536 = vunpack.c.h.b16 %v442
        %v537 = vunpack.c.l.b16 %v443
        %v538 = vunpack.c.h.b16 %v443
        %v539 = vunpack.c.l.b16 %v444
        %v540 = vunpack.c.h.b16 %v444
        %v541 = vunpack.c.l.b16 %v445
        %v542 = vunpack.c.h.b16 %v445
        %v543 = vunpack.c.l.b16 %v446
        %v544 = vunpack.c.h.b16 %v446
        %v545 = vunpack.c.l.b16 %v447
        %v546 = vunpack.c.h.b16 %v447
        %v547 = vunpack.c.l.b16 %v448
        %v548 = vunpack.c.h.b16 %v448
        %v549 = vunpack.c.l.b16 %v449
        %v550 = vunpack.c.h.b16 %v449
        %v551 = vunpack.c.l.b16 %v450
        %v552 = vunpack.c.h.b16 %v450
        %v553 = vunpack.c.l.b16 %v451
        %v554 = vunpack.c.h.b16 %v451
        %v555 = vunpack.c.l.b16 %v452
        %v556 = vunpack.c.h.b16 %v452
        %v557 = vunpack.c.l.b16 %v453
        %v558 = vunpack.c.h.b16 %v453
        %v559 = vunpack.c.l.b16 %v454
        %v560 = vunpack.c.h.b16 %v454
        %v561 = vpack.c.b16 %v499, %v497
        %v562 = vpack.c.b16 %v500, %v498
        %v563 = vpack.c.b16 %v503, %v501
        %v564 = vpack.c.b16 %v504, %v502
        %v565 = vpack.c.b16 %v507, %v505
        %v566 = vpack.c.b16 %v508, %v506
        %v567 = vpack.c.b16 %v511, %v509
        %v568 = vpack.c.b16 %v512, %v510
        %v569 = vpack.c.b16 %v515, %v513
        %v570 = vpack.c.b16 %v516, %v514
        %v571 = vpack.c.b16 %v519, %v517
        %v572 = vpack.c.b16 %v520, %v518
        %v573 = vpack.c.b16 %v523, %v521
        %v574 = vpack.c.b16 %v524, %v522
        %v575 = vpack.c.b16 %v527, %v525
        %v576 = vpack.c.b16 %v528, %v526
        %v577 = vpack.c.b16 %v531, %v529
        %v578 = vpack.c.b16 %v532, %v530
        %v579 = vpack.c.b16 %v535, %v533
        %v580 = vpack.c.b16 %v536, %v534
        %v581 = vpack.c.b16 %v539, %v537
        %v582 = vpack.c.b16 %v540, %v538
        %v583 = vpack.c.b16 %v543, %v541
        %v584 = vpack.c.b16 %v544, %v542
        %v585 = vpack.c.b16 %v547, %v545
        %v586 = vpack.c.b16 %v548, %v546
        %v587 = vpack.c.b16 %v551, %v549
        %v588 = vpack.c.b16 %v552, %v550
        %v589 = vpack.c.b16 %v555, %v553
        %v590 = vpack.c.b16 %v556, %v554
        %v591 = vpack.c.b16 %v559, %v557
        %v592 = vpack.c.b16 %v560, %v558
        %625 = vmatprep.subr.bf16.mxu0 %v576
        %626 = vmatpush1.bf16.msra.mxu0 %v575
        %627 = vmatprep.subr.bf16.mxu0 %v574
        %628 = vmatpush1.bf16.msra.mxu0 %v573
        %629 = vmatprep.subr.bf16.mxu0 %v572
        %630 = vmatpush1.bf16.msra.mxu0 %v571
        %631 = vmatprep.subr.bf16.mxu0 %v570
        %632 = vmatpush1.bf16.msra.mxu0 %v569
        %633 = vmatprep.subr.bf16.mxu0 %v568
        %634 = vmatpush1.bf16.msra.mxu0 %v567
        %635 = vmatprep.subr.bf16.mxu0 %v566
        %636 = vmatpush1.bf16.msra.mxu0 %v565
        %637 = vmatprep.subr.bf16.mxu0 %v564
        %638 = vmatpush1.bf16.msra.mxu0 %v563
        %639 = vmatprep.subr.bf16.mxu0 %v562
        %640 = vmatpush1.bf16.msra.mxu0 %v561
        %641 = vmatprep.subr.bf16.mxu0 %v592
        %642 = vmatpush2.bf16.msra.mxu0 %v591
        %643 = vmatprep.subr.bf16.mxu0 %v590
        %644 = vmatpush2.bf16.msra.mxu0 %v589
        %645 = vmatprep.subr.bf16.mxu0 %v588
        %646 = vmatpush2.bf16.msra.mxu0 %v587
        %647 = vmatprep.subr.bf16.mxu0 %v586
        %648 = vmatpush2.bf16.msra.mxu0 %v585
        %649 = vmatprep.subr.bf16.mxu0 %v584
        %650 = vmatpush2.bf16.msra.mxu0 %v583
        %651 = vmatprep.subr.bf16.mxu0 %v582
        %652 = vmatpush2.bf16.msra.mxu0 %v581
        %653 = vmatprep.subr.bf16.mxu0 %v580
        %654 = vmatpush2.bf16.msra.mxu0 %v579
        %655 = vmatprep.subr.bf16.mxu0 %v578
        %656 = vmatpush2.bf16.msra.mxu0 %v577
        %657 = vmatprep.mubr.bf16.mxu0 %v462
        %658 = vmatmul.mubr.bf16.gmra.mxu0 %v461
        %v659 = vpop.f32.mrf.mxu0
        %v660 = vadd.f32 0.0, %v659
        %v661 = vpop.f32.mrf.mxu0
        %v662 = vadd.f32 0.0, %v661
        %v663 = vpop.f32.mrf.mxu0
        %v664 = vadd.f32 0.0, %v663
        %v665 = vpop.f32.mrf.mxu0
        %v666 = vadd.f32 0.0, %v665
        %667 = vdwg.mxu0
        %v668 = vadd.f32 %v417, %v660
        %v669 = vadd.f32 %v418, %v662
        %v670 = vadd.f32 %v419, %v664
        %v671 = vadd.f32 %v420, %v666
        %672 = vst [vmem:[#allocation2] sm:$0xff] %v668
        %673 = vst [vmem:[#allocation2 + $0x8] sm:$0xff] %v669
        %674 = vst [vmem:[#allocation2 + $0x10] sm:$0xff] %v670
        %675 = vst [vmem:[#allocation2 + $0x18] sm:$0xff] %v671
        %p676 = scmp.eq.s32.totalorder %s26, 1
        // Predicated region
        $region87: #{graph_projector_forward.1} parent=73 // pred_check
          %p677 = pneg %p676
        $region88: #{graph_projector_forward.1} parent=73 // pred_check_branch
          %679 = sbr.rel (%p677) target = $region90
        $region89: #{graph_projector_forward.1} parent=73 // pred_region
          %v680 = vld [vmem:[#allocation2] sm:$0xff]
          %v681 = vld [vmem:[#allocation2 + $0x8] sm:$0xff]
          %v682 = vld [vmem:[#allocation2 + $0x10] sm:$0xff]
          %v683 = vld [vmem:[#allocation2 + $0x18] sm:$0xff]
          %v684 = vld [vmem:[%s385] sm:$0x3]
          %v686 = vlaneseq
          %v687 = vshrl.u32 %v686, 7
          %v688 = vsub.s32 0, %v687
          %v689 = vrot.slane %v684, %v688
          %v690 = vlaneseq
          %v691 = vshrl.u32 %v690, 7
          %v692 = vsub.s32 1, %v691
          %v693 = vrot.slane %v684, %v692
          %v696 = vadd.f32 %v680, %v689
          %v697 = vadd.f32 %v681, %v693
          %v698 = vadd.f32 %v682, %v689
          %v699 = vadd.f32 %v683, %v693
          %v700 = vadd.f32 %v696, %v697
          %701 = vadd.xlane.f32.xlu0 %v700
          %v702 = vpop.xlane.xlu0 %701
          %v703 = vadd.f32 %v698, %v699
          %704 = vadd.xlane.f32.xlu0 %v703
          %v705 = vpop.xlane.xlu0 %704
          %v706 = vrcp.pop 256.0
          %v707 = vmul.f32 %v702, %v706
          %v708 = vmul.f32 %v705, %v706
          %v709 = vsub.f32 %v696, %v707
          %v710 = vsub.f32 %v697, %v707
          %v711 = vsub.f32 %v698, %v708
          %v712 = vsub.f32 %v699, %v708
          %v713 = vmul.f32 %v709, %v709
          %v714 = vmul.f32 %v710, %v710
          %v715 = vmul.f32 %v711, %v711
          %v716 = vmul.f32 %v712, %v712
          %v717 = vadd.f32 %v713, %v714
          %718 = vadd.xlane.f32.xlu0 %v717
          %v719 = vpop.xlane.xlu0 %718
          %v720 = vadd.f32 %v715, %v716
          %721 = vadd.xlane.f32.xlu0 %v720
          %v722 = vpop.xlane.xlu0 %721
          %v723 = vmul.f32 %v719, %v706
          %v724 = vmul.f32 %v722, %v706
          %v725 = vadd.f32 %v723, 1e-05
          %v726 = vadd.f32 %v724, 1e-05
          %v727 = vrsqrt.pop %v725
          %v728 = vrsqrt.pop %v726
          %v729 = vmul.f32 %v709, %v727
          %v730 = vmul.f32 %v710, %v727
          %v731 = vmul.f32 %v711, %v728
          %v732 = vmul.f32 %v712, %v728
          %v733 = vld [vmem:[%s390] sm:$0x3]
          %v735 = vlaneseq
          %v736 = vshrl.u32 %v735, 7
          %v737 = vsub.s32 0, %v736
          %v738 = vrot.slane %v733, %v737
          %v739 = vlaneseq
          %v740 = vshrl.u32 %v739, 7
          %v741 = vsub.s32 1, %v740
          %v742 = vrot.slane %v733, %v741
          %v745 = vmul.f32 %v729, %v738
          %v746 = vmul.f32 %v730, %v742
          %v747 = vmul.f32 %v731, %v738
          %v748 = vmul.f32 %v732, %v742
          %v749 = vld [vmem:[%s395] sm:$0x3]
          %v751 = vlaneseq
          %v752 = vshrl.u32 %v751, 7
          %v753 = vsub.s32 0, %v752
          %v754 = vrot.slane %v749, %v753
          %v755 = vlaneseq
          %v756 = vshrl.u32 %v755, 7
          %v757 = vsub.s32 1, %v756
          %v758 = vrot.slane %v749, %v757
          %v761 = vadd.f32 %v745, %v754
          %v762 = vadd.f32 %v746, %v758
          %v763 = vadd.f32 %v747, %v754
          %v764 = vadd.f32 %v748, %v758
          %765 = vst [vmem:[%s406] sm:$0xff] %v761
          %766 = vst [vmem:[%s406 + $0x8] sm:$0xff] %v762
          %767 = vst [vmem:[%s406 + $0x10] sm:$0xff] %v763
          %768 = vst [vmem:[%s406 + $0x18] sm:$0xff] %v764
        $region90: #{graph_projector_forward.1} parent=73 // pred_fallthru
          _
        %s769 = smul.u32 2, %s24
        %s770 = smul.u32 2, %s25
        %p771 = scmp.lt.s32.totalorder %s769, 1
        %s772 = scalar_select %p771, %s769, 1
        %p773 = scmp.lt.s32.totalorder %s770, 1
        %s774 = scalar_select %p773, %s770, 1
        %s775 = smul.addr %s772, 2
        %s776 = sadd.s32 %s774, %s775
        %s777 = smul.addr %s776, 8
        %s778 = scalar_lea.vmem %s5, %s777
        // Predicated region
        $region91: #{graph_projector_forward.1} parent=73 // pred_check
          %p779 = pneg %p192
        $region92: #{graph_projector_forward.1} parent=73 // pred_check_branch
          %781 = sbr.rel (%p779) target = $region94
        $region93: #{graph_projector_forward.1} parent=73 // pred_region
          %s782 = smul.u32 2, %s24
          %s783 = smul.u32 2, %s25
        $region94: #{graph_projector_forward.1} parent=73 // pred_fallthru
          _
        // Predicated region
        $region95: #{graph_projector_forward.1} parent=73 // pred_check
          %p784 = pneg %p192
        $region96: #{graph_projector_forward.1} parent=73 // pred_check_branch
          %786 = sbr.rel (%p784) target = $region98
        $region97: #{graph_projector_forward.1} parent=73 // pred_region
          %s787 = smul.u32 2, %s24
          %s788 = smul.u32 2, %s25
          %p789 = scmp.lt.s32.totalorder %s787, 1
          %s790 = scalar_select %p789, %s787, 1
          %p791 = scmp.lt.s32.totalorder %s788, 1
          %s792 = scalar_select %p791, %s788, 1
          %s793 = smul.addr %s790, 2
          %s794 = sadd.s32 %s792, %s793
          %s795 = smul.addr %s794, 8
          %s796 = scalar_lea.vmem %s5, %s795
        $region98: #{graph_projector_forward.1} parent=73 // pred_fallthru
          _
      $region74: #{graph_projector_forward.1} parent=5 // pred_fallthru
        _
      %p797 = scmp.le.s32.totalorder 2, %s14
      // Predicated region
      $region99: #{graph_projector_forward.1} parent=5 // pred_check
        %p798 = pneg %p797
      $region100: #{graph_projector_forward.1} parent=5 // pred_check_branch
        %800 = sbr.rel (%p798) target = $region102
      $region101: #{graph_projector_forward.1} parent=5 // pred_region
        %s801 = ssub.s32 %s14, 2
      $region102: #{graph_projector_forward.1} parent=5 // pred_fallthru
        _
    $region6: #{graph_projector_forward.1} parent=1 // loop_footer
      %s18 = sadd.s32 1, %s14
    $region7: #{graph_projector_forward.1} parent=1 // loop_footer_branch
      %13 = sbr.rel target = $region3
    $region8: #{graph_projector_forward.1} parent=1 // loop_exit
      _
    %802 = vsyncpa [#allocation5], 1
    %s803 = scalar_lea.sflag [#allocation5], 1
    %804 = vsyncpa %s803, 1

</llo_original>
